<compile_context>
chip_gen: v5e
topology: v5e:2x2
jax: 0.10.0
libtpu: 0.0.40
codegen_flags: <defaults>
</compile_context>

<pallas_src>
import jax
import jax.numpy as jnp
from jax.experimental import pallas as pl
from jax.experimental.pallas import tpu as pltpu


def _vmem_limit_bytes():
    # v5e/v6e: 128 MiB physical VMEM, v7x: 64 MiB.  Use ~3/4 of it so large tiles and
    # deeper buffering are allowed without risking VMEM OOM on v7x.
    try:
        phys = int(pltpu.get_tpu_info().vmem_capacity_bytes)
    except Exception:
        phys = 64 * 1024 * 1024  # conservative (v7x) fallback
    return max(32 * 1024 * 1024, (phys * 3) // 4)


def _wrapper1_single_k_kernel(x_ref, w_ref, b_ref, y_ref, nrm_x_ref, nrm_y_ref):
    """Fast path: whole reduction dim in one step.  Grid = (i over batch, j over outputs)."""
    j = pl.program_id(1)

    x = x_ref[...]
    # bf16 (or whatever dtype the wrapper gave w) into the MXU, f32 accumulate.
    y = jnp.dot(x.astype(w_ref.dtype), w_ref[...], preferred_element_type=jnp.float32)
    y = y + b_ref[...].astype(jnp.float32)

    y_out = y.astype(y_ref.dtype)
    y_ref[...] = y_out

    # norm(outputs) partial: sum-of-squares of the *returned* outputs, lane-dense slab.
    yf = y_out.astype(jnp.float32)
    nrm_y_ref[...] = jnp.zeros((8, 128), jnp.float32) + jnp.sum(yf * yf)

    # norm(inputs) partial: only the j == 0 column does the work; other columns write zeros
    # so the wrapper can reduce the whole slab safely.
    @pl.when(j == 0)
    def _x_norm():
        xf = x.astype(jnp.float32)
        nrm_x_ref[...] = jnp.zeros((8, 128), jnp.float32) + jnp.sum(xf * xf)

    @pl.when(j != 0)
    def _x_norm_zero():
        nrm_x_ref[...] = jnp.zeros((8, 128), jnp.float32)


def _wrapper1_multi_k_kernel(x_ref, w_ref, b_ref, y_ref, nrm_x_ref, nrm_y_ref,
                             acc_ref, xsq_ref):
    """General path.  Grid = (i, j, k) with k = hidden/reduction axis (last, 'arbitrary')."""
    j = pl.program_id(1)
    k = pl.program_id(2)
    nk = pl.num_programs(2)

    @pl.when(k == 0)
    def _init_acc():
        acc_ref[...] = jnp.zeros_like(acc_ref)

    @pl.when(jnp.logical_and(j == 0, k == 0))
    def _init_xsq():
        xsq_ref[...] = jnp.zeros_like(xsq_ref)

    # Inner-module hot path: bf16 operands into the MXU, f32 accumulation in VMEM.
    x = x_ref[...]
    acc_ref[...] += jnp.dot(x.astype(w_ref.dtype), w_ref[...],
                            preferred_element_type=jnp.float32)

    # norm(inputs) partials: elementwise (VPU-only) square-accumulate, j == 0 column only.
    # The single cross-lane reduce is deferred to the finalize step.
    @pl.when(j == 0)
    def _acc_xsq():
        xf = x.astype(jnp.float32)
        xsq_ref[...] = xsq_ref[...] + xf * xf

    @pl.when(k == nk - 1)
    def _finalize():
        # Bias added once, at the final reduction step.
        y = acc_ref[...] + b_ref[...].astype(jnp.float32)
        y_out = y.astype(y_ref.dtype)
        y_ref[...] = y_out
        yf = y_out.astype(jnp.float32)
        nrm_y_ref[...] = jnp.zeros((8, 128), jnp.float32) + jnp.sum(yf * yf)

    @pl.when(jnp.logical_and(j == 0, k == nk - 1))
    def _x_norm():
        nrm_x_ref[...] = jnp.zeros((8, 128), jnp.float32) + jnp.sum(xsq_ref[...])

    @pl.when(jnp.logical_and(j != 0, k == nk - 1))
    def _x_norm_zero():
        nrm_x_ref[...] = jnp.zeros((8, 128), jnp.float32)


def wrapper1_forward(x, w, b, *, tb=256, to=512, tk=512, use_bf16=True):
    """Fused Wrapper1(Linear): returns (outputs, norm_inputs, norm_outputs)."""
    B, H = x.shape
    H2, O = w.shape
    assert H == H2 and b.shape == (O,)

    # Tile selection (lane/sublane aligned; tiles must divide the problem dims).
    tb, to, tk = min(tb, B), min(to, O), min(tk, H)
    assert B % tb == 0 and O % to == 0 and H % tk == 0, "dims must divide tiles"
    assert (tb % 8 == 0) or (tb == B)
    assert (to % 128 == 0) or (to == O)
    assert (tk % 128 == 0) or (tk == H)

    # Keep at least two parallel tiles so both TensorCores get work on megacore parts (v7x).
    if (B // tb) * (O // to) == 1 and to % 256 == 0:
        to //= 2

    gi, gj, gk = B // tb, O // to, H // tk

    # bf16 weights: MXU-native on v5e/v6e/v7x and halves the dominant HBM stream.
    # x stays f32 into the kernel so norm(inputs) is exact; it is cast in-register for the dot.
    w_mx = w.astype(jnp.bfloat16) if use_bf16 else w
    b2 = b.reshape(1, O)

    out_shape = (
        jax.ShapeDtypeStruct((B, O), x.dtype),                      # outputs
        jax.ShapeDtypeStruct((gi * 8, gj * 128), jnp.float32),      # sum-sq(inputs) partials
        jax.ShapeDtypeStruct((gi * 8, gj * 128), jnp.float32),      # sum-sq(outputs) partials
    )

    if gk == 1:
        # Single reduction step: no accumulator scratch, no init/finalize phases.
        grid_spec = pltpu.PrefetchScalarGridSpec(
            num_scalar_prefetch=0,
            grid=(gi, gj),
            in_specs=[
                pl.BlockSpec((tb, H), lambda i, j: (i, 0)),    # x
                pl.BlockSpec((H, to), lambda i, j: (0, j)),    # w (bf16)
                pl.BlockSpec((1, to), lambda i, j: (0, j)),    # bias
            ],
            out_specs=(
                pl.BlockSpec((tb, to), lambda i, j: (i, j)),   # y
                pl.BlockSpec((8, 128), lambda i, j: (i, j)),   # norm(x) partials
                pl.BlockSpec((8, 128), lambda i, j: (i, j)),   # norm(y) partials
            ),
        )
        kernel = _wrapper1_single_k_kernel
        dim_sem = ("parallel", "parallel")
    else:
        grid_spec = pltpu.PrefetchScalarGridSpec(
            num_scalar_prefetch=0,
            grid=(gi, gj, gk),
            in_specs=[
                pl.BlockSpec((tb, tk), lambda i, j, k: (i, k)),   # x
                pl.BlockSpec((tk, to), lambda i, j, k: (k, j)),   # w (bf16)
                # TODO(synk): on v5e consider pipeline_mode=pl.Buffered(3) on x/w to hide
                # the lower HBM bandwidth; default double-buffering is used here.
                pl.BlockSpec((1, to), lambda i, j, k: (0, j)),    # bias
            ],
            out_specs=(
                pl.BlockSpec((tb, to), lambda i, j, k: (i, j)),   # y
                pl.BlockSpec((8, 128), lambda i, j, k: (i, j)),   # norm(x) partials
                pl.BlockSpec((8, 128), lambda i, j, k: (i, j)),   # norm(y) partials
            ),
            scratch_shapes=[
                pltpu.VMEM((tb, to), jnp.float32),   # y accumulator
                pltpu.VMEM((tb, tk), jnp.float32),   # elementwise sum-sq(x) accumulator
            ],
        )
        kernel = _wrapper1_multi_k_kernel
        dim_sem = ("parallel", "parallel", "arbitrary")

    y, nrm_x, nrm_y = pl.pallas_call(
        kernel,
        out_shape=out_shape,
        grid_spec=grid_spec,
        compiler_params=pltpu.CompilerParams(
            dimension_semantics=dim_sem,
            vmem_limit_bytes=_vmem_limit_bytes(),
        ),
    )(x, w_mx, b2)

    # Finish the Frobenius norms (cross-tile reduction + sqrt) in the wrapper.
    # Each (8,128) slab is a broadcast of one partial sum; lane/sublane 0 carries the value,
    # and j > 0 columns of the x slab hold zeros, so a plain sum over tiles is correct.
    x_ss = jnp.sum(nrm_x.reshape(gi, 8, gj, 128)[:, 0, :, 0])
    y_ss = jnp.sum(nrm_y.reshape(gi, 8, gj, 128)[:, 0, :, 0])
    norm_in = jnp.sqrt(x_ss)
    norm_out = jnp.sqrt(y_ss)
    return y, norm_in, norm_out


if __name__ == "__main__":
    # Small but lane-aligned shapes: batch=16, hidden=256, dim_output=256.
    B, H, O = 16, 256, 256
    key = jax.random.PRNGKey(0)
    kx, kw, kb = jax.random.split(key, 3)

    x = jax.random.normal(kx, (B, H), dtype=jnp.float32)
    w = jax.random.normal(kw, (H, O), dtype=jnp.float32) * (1.0 / jnp.sqrt(H))
    b = jax.random.normal(kb, (O,), dtype=jnp.float32) * 0.01

    # Reference that matches the bf16-fed MXU (operands rounded to bf16, f32 accumulate).
    y_ref = jnp.dot(x.astype(jnp.bfloat16), w.astype(jnp.bfloat16),
                    preferred_element_type=jnp.float32) + b

    # 1) Default tile selection -> single reduction step (fast-path kernel), grid (1, 2).
    y, norm_in, norm_out = wrapper1_forward(x, w, b)
    jax.block_until_ready((y, norm_in, norm_out))
    assert jnp.allclose(y, y_ref, atol=2e-3, rtol=1e-3)
    assert jnp.allclose(norm_in, jnp.linalg.norm(x), atol=1e-2, rtol=1e-3)
    assert jnp.allclose(norm_out, jnp.linalg.norm(y_ref), atol=1e-2, rtol=1e-3)

    # 2) Force the k-tiled (multi reduction step) kernel on the same problem, grid (1, 2, 2).
    y2, norm_in2, norm_out2 = wrapper1_forward(x, w, b, tb=16, to=128, tk=128)
    jax.block_until_ready((y2, norm_in2, norm_out2))
    assert jnp.allclose(y2, y_ref, atol=2e-3, rtol=1e-3)
    assert jnp.allclose(norm_in2, jnp.linalg.norm(x), atol=1e-2, rtol=1e-3)
    assert jnp.allclose(norm_out2, jnp.linalg.norm(y_ref), atol=1e-2, rtol=1e-3)

    # Mimic Wrapper1's logging.info line (host-side; .item() has no kernel equivalent).
    # TODO(synk): logging/.item() is host-side only; the kernel just returns the norms.
    print("forward wrapped_linear: {} / {} = {}".format(
        float(norm_out), float(norm_in), float(norm_out) / float(norm_in)))

    print("KERNEL_OK")
</pallas_src>

<mosaic_0001>
module attributes {stable_mosaic.version = 11 : i64} {
  func.func @_wrapper1_single_k_kernel(%arg0: i32, %arg1: i32, %arg2: memref<16x256xf32, #tpu.memory_space<vmem>>, %arg3: memref<256x128xbf16, #tpu.memory_space<vmem>>, %arg4: memref<1x128xf32, #tpu.memory_space<vmem>>, %arg5: memref<16x128xf32, #tpu.memory_space<vmem>>, %arg6: memref<8x128xf32, #tpu.memory_space<vmem>>, %arg7: memref<8x128xf32, #tpu.memory_space<vmem>>) attributes {dimension_semantics = [#tpu.dimension_semantics<parallel>, #tpu.dimension_semantics<parallel>], iteration_bounds = array<i64: 1, 2>, scalar_prefetch = 0 : i64, scratch_operands = 0 : i64, tpu.core_type = #tpu.core_type<tc>, window_params = [{transform_indices = @transform_0, window_bounds = array<i64: 16, 256>}, {transform_indices = @transform_1, window_bounds = array<i64: 256, 128>}, {transform_indices = @transform_2, window_bounds = array<i64: 1, 128>}, {transform_indices = @transform_3, window_bounds = array<i64: 16, 128>}, {transform_indices = @transform_4, window_bounds = array<i64: 8, 128>}, {transform_indices = @transform_5, window_bounds = array<i64: 8, 128>}]} {
    %c0 = arith.constant 0 : index
    %c0_0 = arith.constant 0 : index
    %0 = vector.load %arg2[%c0, %c0_0] : memref<16x256xf32, #tpu.memory_space<vmem>>, vector<16x256xf32>
    %1 = arith.truncf %0 : vector<16x256xf32> to vector<16x256xbf16>
    %c0_1 = arith.constant 0 : index
    %c0_2 = arith.constant 0 : index
    %2 = vector.load %arg3[%c0_1, %c0_2] : memref<256x128xbf16, #tpu.memory_space<vmem>>, vector<256x128xbf16>
    %cst = arith.constant dense<0.000000e+00> : vector<16x128xf32>
    %3 = tpu.matmul %1, %2, %cst {dimension_numbers = #tpu.dot_dimension_numbers<[1], [0], [0], [1], [0, 0, 1, 1], [], []>} : vector<16x256xbf16>, vector<256x128xbf16>, vector<16x128xf32> -> vector<16x128xf32>
    %c0_3 = arith.constant 0 : index
    %c0_4 = arith.constant 0 : index
    %4 = vector.load %arg4[%c0_3, %c0_4] : memref<1x128xf32, #tpu.memory_space<vmem>>, vector<1x128xf32>
    %5 = vector.broadcast %4 : vector<1x128xf32> to vector<16x128xf32>
    %6 = arith.addf %3, %5 : vector<16x128xf32>
    %c0_5 = arith.constant 0 : index
    %c0_6 = arith.constant 0 : index
    %7 = vector.load %arg5[%c0_5, %c0_6] : memref<16x128xf32, #tpu.memory_space<vmem>>, vector<16x128xf32>
    tpu.vector_store %arg5[%c0_5, %c0_6], %6 {strides = array<i32>} : memref<16x128xf32, #tpu.memory_space<vmem>>, vector<16x128xf32>,
    %cst_7 = arith.constant 0.000000e+00 : f32
    %8 = vector.broadcast %cst_7 : f32 to vector<8x128xf32>
    %9 = arith.mulf %6, %6 : vector<16x128xf32>
    %10 = vector.shape_cast %9 : vector<16x128xf32> to vector<1x16x128xf32>
    %cst_8 = arith.constant dense<0.000000e+00> : vector<1xf32>
    %11 = vector.multi_reduction <add>, %10, %cst_8 [1, 2] : vector<1x16x128xf32> to vector<1xf32>
    %12 = vector.shape_cast %11 : vector<1xf32> to vector<1x1x1xf32>
    %13 = vector.extract %12[0, 0, 0] : f32 from vector<1x1x1xf32>
    %14 = vector.broadcast %13 : f32 to vector<8x128xf32>
    %15 = arith.addf %8, %14 : vector<8x128xf32>
    %c0_9 = arith.constant 0 : index
    %c0_10 = arith.constant 0 : index
    %16 = vector.load %arg7[%c0_9, %c0_10] : memref<8x128xf32, #tpu.memory_space<vmem>>, vector<8x128xf32>
    tpu.vector_store %arg7[%c0_9, %c0_10], %15 {strides = array<i32>} : memref<8x128xf32, #tpu.memory_space<vmem>>, vector<8x128xf32>,
    %c0_i32 = arith.constant 0 : i32
    %17 = arith.cmpi eq, %arg1, %c0_i32 : i32
    %18 = arith.extui %17 : i1 to i32
    %c0_i32_11 = arith.constant 0 : i32
    %19 = arith.cmpi ne, %18, %c0_i32_11 : i32
    scf.if %19 {
      %cst_14 = arith.constant 0.000000e+00 : f32
      %23 = vector.broadcast %cst_14 : f32 to vector<8x128xf32>
      %24 = arith.mulf %0, %0 : vector<16x256xf32>
      %25 = vector.shape_cast %24 : vector<16x256xf32> to vector<1x16x256xf32>
      %cst_15 = arith.constant dense<0.000000e+00> : vector<1xf32>
      %26 = vector.multi_reduction <add>, %25, %cst_15 [1, 2] : vector<1x16x256xf32> to vector<1xf32>
      %27 = vector.shape_cast %26 : vector<1xf32> to vector<1x1x1xf32>
      %28 = vector.extract %27[0, 0, 0] : f32 from vector<1x1x1xf32>
      %29 = vector.broadcast %28 : f32 to vector<8x128xf32>
      %30 = arith.addf %23, %29 : vector<8x128xf32>
      %c0_16 = arith.constant 0 : index
      %c0_17 = arith.constant 0 : index
      %31 = vector.load %arg6[%c0_16, %c0_17] : memref<8x128xf32, #tpu.memory_space<vmem>>, vector<8x128xf32>
      tpu.vector_store %arg6[%c0_16, %c0_17], %30 {strides = array<i32>} : memref<8x128xf32, #tpu.memory_space<vmem>>, vector<8x128xf32>,
    } else {
    }
    %c0_i32_12 = arith.constant 0 : i32
    %20 = arith.cmpi ne, %arg1, %c0_i32_12 : i32
    %21 = arith.extui %20 : i1 to i32
    %c0_i32_13 = arith.constant 0 : i32
    %22 = arith.cmpi ne, %21, %c0_i32_13 : i32
    scf.if %22 {
      %cst_14 = arith.constant 0.000000e+00 : f32
      %23 = vector.broadcast %cst_14 : f32 to vector<8x128xf32>
      %c0_15 = arith.constant 0 : index
      %c0_16 = arith.constant 0 : index
      %24 = vector.load %arg6[%c0_15, %c0_16] : memref<8x128xf32, #tpu.memory_space<vmem>>, vector<8x128xf32>
      tpu.vector_store %arg6[%c0_15, %c0_16], %23 {strides = array<i32>} : memref<8x128xf32, #tpu.memory_space<vmem>>, vector<8x128xf32>,
    } else {
    }
    return
  }
  func.func @transform_0(%arg0: i32, %arg1: i32) -> (i32, i32) {
    %c0_i32 = arith.constant 0 : i32
    %c0_i32_0 = arith.constant 0 : i32
    return %arg0, %c0_i32 : i32, i32
  }
  func.func @transform_1(%arg0: i32, %arg1: i32) -> (i32, i32) {
    %c0_i32 = arith.constant 0 : i32
    %c0_i32_0 = arith.constant 0 : i32
    return %c0_i32, %arg1 : i32, i32
  }
  func.func @transform_2(%arg0: i32, %arg1: i32) -> (i32, i32) {
    %c0_i32 = arith.constant 0 : i32
    %c0_i32_0 = arith.constant 0 : i32
    return %c0_i32, %arg1 : i32, i32
  }
  func.func @transform_3(%arg0: i32, %arg1: i32) -> (i32, i32) {
    %c0_i32 = arith.constant 0 : i32
    return %arg0, %arg1 : i32, i32
  }
  func.func @transform_4(%arg0: i32, %arg1: i32) -> (i32, i32) {
    %c0_i32 = arith.constant 0 : i32
    return %arg0, %arg1 : i32, i32
  }
  func.func @transform_5(%arg0: i32, %arg1: i32) -> (i32, i32) {
    %c0_i32 = arith.constant 0 : i32
    return %arg0, %arg1 : i32, i32
  }
}

</mosaic_0001>

<llo_original>
// kernel: tpu_custom_call.1
$region0: #{tpu_custom_call.1}
  #allocation0 [shape = 'u32[]', space=smem, size = 0x4, offset = 0x4, fixed_abs, tag = 'smem constant byte address 0x4 - core index']
  #allocation1 [shape = 'u32[72,128]{1,0:T(1,128)}', space=vmem, size = 0x9000, scoped, tag = 'internal scratch']
  %s0 = inlined_call_operand.hbm [shape: f32[16,256], index: 0, kind: input, shape index: {}]
  %s1 = inlined_call_operand.hbm [shape: bf16[256,256], index: 1, kind: input, shape index: {}]
  %s2 = inlined_call_operand.hbm [shape: f32[1,256], index: 2, kind: input, shape index: {}]
  %s3 = inlined_call_operand.hbm [shape: f32[16,256], index: 3, kind: output, shape index: {0}]
  %s4 = inlined_call_operand.hbm [shape: f32[8,256], index: 4, kind: output, shape index: {1}]
  %s5 = inlined_call_operand.hbm [shape: f32[8,256], index: 5, kind: output, shape index: {2}]
  %6 = xla_tuple %s3, %s4, %s5
  %s7 = sld [smem:[#allocation0]]
  $region81: #{tpu_custom_call.1} parent=0
    _
  %s9 = ssub.s32 1, %s7
  %s10 = scalar_select 0, %s9, %s7
  $region1: #{tpu_custom_call.1} parent=0
    #allocation2 [shape = 'u8[16384]{0}', space=vmem, size = 0x4000, scoped, tag = 'input window, operand 0, single buffered']
    #allocation3 [shape = 's32[2]{0}', space=sflag, size = 0x8, scoped, tag = 'scoped memory for tpu_custom_call.1']
    #allocation4 [shape = 's32[2]{0}', space=sflag, size = 0x8, scoped, tag = 'scoped memory for tpu_custom_call.1']
    #allocation5 [shape = 'u8[131072]{0}', space=vmem, size = 0x20000, scoped, tag = 'input window, operand 1']
    #allocation6 [shape = 's32[2]{0}', space=sflag, size = 0x8, scoped, tag = 'scoped memory for tpu_custom_call.1']
    #allocation7 [shape = 'u8[1024]{0}', space=vmem, size = 0x400, scoped, tag = 'input window, operand 2']
    #allocation8 [shape = 'u8[16384]{0}', space=vmem, size = 0x4000, scoped, tag = 'output window, operand 0']
    #allocation9 [shape = 'u8[8192]{0}', space=vmem, size = 0x2000, scoped, tag = 'output window, operand 1']
    #allocation10 [shape = 's32[2]{0}', space=sflag, size = 0x8, scoped, tag = 'scoped memory for tpu_custom_call.1']
    #allocation11 [shape = 'u8[8192]{0}', space=vmem, size = 0x2000, scoped, tag = 'output window, operand 2']
    %11 = vsyncpa [#allocation3], 0
    %12 = vsyncpa [#allocation6], 0
    %s13 = scalar_lea.sflag [#allocation6], 1
    %14 = vsyncpa %s13, 0
    %15 = vsyncpa [#allocation4], 0
    %s16 = scalar_lea.sflag [#allocation4], 1
    %17 = vsyncpa %s16, 0
    %18 = vsyncpa [#allocation10], 0
    %s19 = scalar_lea.sflag [#allocation10], 1
    %20 = vsyncpa %s19, 0
    loop: start=0, step=1, limit=4
    $region2: #{tpu_custom_call.1} parent=1 // loop_pre_header
      _
    $region3: #{tpu_custom_call.1} parent=1 // loop_header
      %s22 = sphi 0, %s26
      %p23 = scmp.ge.s32.totalorder %s22, 4
      %s29 = sphi 0, %s41
      %s30 = sphi 0, %s37
      %s31 = sphi 0, %s29
      %s32 = sphi 0, %s30
      %s33 = sphi 0, %s31
      %s34 = sphi 0, %s32
      %s44 = sphi 0, %s46
      %s47 = sphi 0, %s44
      %s48 = sphi 0, %s47
      %s64 = sphi 0, %s48
      %s70 = sphi 0, %s72
      %s73 = sphi 0, %s70
      %s74 = sphi 0, %s73
      %s90 = sphi 0, %s74
      %s96 = sphi 0, %s98
      %s99 = sphi 0, %s96
      %s100 = sphi 0, %s99
      %s116 = sphi 0, %s100
      %s124 = sphi 0, %s126
      %s127 = sphi 0, %s124
      %s128 = sphi 0, %s127
      %s144 = sphi 0, %s128
      %s152 = sphi 0, %s154
      %s155 = sphi 0, %s152
      %s156 = sphi 0, %s155
      %s172 = sphi 0, %s156
      %s180 = sphi 0, %s182
      %s183 = sphi 0, %s180
      %s184 = sphi 0, %s183
      %s200 = sphi 0, %s184
    $region4: #{tpu_custom_call.1} parent=1 // loop_header_branch
      %25 = sbr.rel (%p23) target = $region8
    $region5: #{tpu_custom_call.1} parent=1 // loop_body
      %s27 = ssub.s32 %s22, 1
      %s28 = ssub.s32 %s22, 2
      %s35 = sadd.s32 1, %s30
      %p36 = scmp.ge.s32.totalorder %s35, 2
      %s37 = scalar_select %p36, 0, %s35
      %s38 = sadd.s32 1, %s29
      %s39 = scalar_select %p36, %s38, %s29
      %p40 = scmp.ge.s32.totalorder %s39, 1
      %s41 = scalar_select %p40, 0, %s39
      %s42 = ssub.s32 %s29, %s41
      %p43 = scmp.eq.s32.totalorder %s42, 0
      %s45 = sadd.s32 %s44, 1
      %s46 = scalar_select %p43, %s44, %s45
      %p49 = pneg %p43
      %p50 = scmp.eq.s32.totalorder %s22, 1
      %p51 = por %p49, %p50
      %p52 = scmp.ne.s32.totalorder %s44, %s47
      %p53 = scmp.eq.s32.totalorder %s22, 0
      %p54 = por %p52, %p53
      %p55 = scmp.ne.s32.totalorder %s44, %s47
      %p56 = scmp.eq.s32.totalorder %s27, 1
      %p57 = por %p55, %p56
      %p58 = scmp.ne.s32.totalorder %s47, %s48
      %p59 = scmp.eq.s32.totalorder %s27, 0
      %p60 = por %p58, %p59
      %p61 = scmp.ne.s32.totalorder %s47, %s48
      %p62 = scmp.eq.s32.totalorder %s28, 1
      %p63 = por %p61, %p62
      %p65 = scmp.ne.s32.totalorder %s48, %s64
      %p66 = scmp.eq.s32.totalorder %s28, 0
      %p67 = por %p65, %p66
      %s68 = ssub.s32 %s30, %s37
      %p69 = scmp.eq.s32.totalorder %s68, 0
      %s71 = sadd.s32 %s70, 1
      %s72 = scalar_select %p69, %s70, %s71
      %p75 = pneg %p69
      %p76 = scmp.eq.s32.totalorder %s22, 1
      %p77 = por %p75, %p76
      %p78 = scmp.ne.s32.totalorder %s70, %s73
      %p79 = scmp.eq.s32.totalorder %s22, 0
      %p80 = por %p78, %p79
      %p81 = scmp.ne.s32.totalorder %s70, %s73
      %p82 = scmp.eq.s32.totalorder %s27, 1
      %p83 = por %p81, %p82
      %p84 = scmp.ne.s32.totalorder %s73, %s74
      %p85 = scmp.eq.s32.totalorder %s27, 0
      %p86 = por %p84, %p85
      %p87 = scmp.ne.s32.totalorder %s73, %s74
      %p88 = scmp.eq.s32.totalorder %s28, 1
      %p89 = por %p87, %p88
      %p91 = scmp.ne.s32.totalorder %s74, %s90
      %p92 = scmp.eq.s32.totalorder %s28, 0
      %p93 = por %p91, %p92
      %s94 = ssub.s32 %s30, %s37
      %p95 = scmp.eq.s32.totalorder %s94, 0
      %s97 = sadd.s32 %s96, 1
      %s98 = scalar_select %p95, %s96, %s97
      %p101 = pneg %p95
      %p102 = scmp.eq.s32.totalorder %s22, 1
      %p103 = por %p101, %p102
      %p104 = scmp.ne.s32.totalorder %s96, %s99
      %p105 = scmp.eq.s32.totalorder %s22, 0
      %p106 = por %p104, %p105
      %p107 = scmp.ne.s32.totalorder %s96, %s99
      %p108 = scmp.eq.s32.totalorder %s27, 1
      %p109 = por %p107, %p108
      %p110 = scmp.ne.s32.totalorder %s99, %s100
      %p111 = scmp.eq.s32.totalorder %s27, 0
      %p112 = por %p110, %p111
      %p113 = scmp.ne.s32.totalorder %s99, %s100
      %p114 = scmp.eq.s32.totalorder %s28, 1
      %p115 = por %p113, %p114
      %p117 = scmp.ne.s32.totalorder %s100, %s116
      %p118 = scmp.eq.s32.totalorder %s28, 0
      %p119 = por %p117, %p118
      %s120 = ssub.s32 %s29, %s41
      %s121 = ssub.s32 %s30, %s37
      %s122 = sor.u32 %s120, %s121
      %p123 = scmp.eq.s32.totalorder %s122, 0
      %s125 = sadd.s32 %s124, 1
      %s126 = scalar_select %p123, %s124, %s125
      %p129 = pneg %p123
      %p130 = scmp.eq.s32.totalorder %s22, 1
      %p131 = por %p129, %p130
      %p132 = scmp.ne.s32.totalorder %s124, %s127
      %p133 = scmp.eq.s32.totalorder %s22, 0
      %p134 = por %p132, %p133
      %p135 = scmp.ne.s32.totalorder %s124, %s127
      %p136 = scmp.eq.s32.totalorder %s27, 1
      %p137 = por %p135, %p136
      %p138 = scmp.ne.s32.totalorder %s127, %s128
      %p139 = scmp.eq.s32.totalorder %s27, 0
      %p140 = por %p138, %p139
      %p141 = scmp.ne.s32.totalorder %s127, %s128
      %p142 = scmp.eq.s32.totalorder %s28, 1
      %p143 = por %p141, %p142
      %p145 = scmp.ne.s32.totalorder %s128, %s144
      %p146 = scmp.eq.s32.totalorder %s28, 0
      %p147 = por %p145, %p146
      %s148 = ssub.s32 %s29, %s41
      %s149 = ssub.s32 %s30, %s37
      %s150 = sor.u32 %s148, %s149
      %p151 = scmp.eq.s32.totalorder %s150, 0
      %s153 = sadd.s32 %s152, 1
      %s154 = scalar_select %p151, %s152, %s153
      %p157 = pneg %p151
      %p158 = scmp.eq.s32.totalorder %s22, 1
      %p159 = por %p157, %p158
      %p160 = scmp.ne.s32.totalorder %s152, %s155
      %p161 = scmp.eq.s32.totalorder %s22, 0
      %p162 = por %p160, %p161
      %p163 = scmp.ne.s32.totalorder %s152, %s155
      %p164 = scmp.eq.s32.totalorder %s27, 1
      %p165 = por %p163, %p164
      %p166 = scmp.ne.s32.totalorder %s155, %s156
      %p167 = scmp.eq.s32.totalorder %s27, 0
      %p168 = por %p166, %p167
      %p169 = scmp.ne.s32.totalorder %s155, %s156
      %p170 = scmp.eq.s32.totalorder %s28, 1
      %p171 = por %p169, %p170
      %p173 = scmp.ne.s32.totalorder %s156, %s172
      %p174 = scmp.eq.s32.totalorder %s28, 0
      %p175 = por %p173, %p174
      %s176 = ssub.s32 %s29, %s41
      %s177 = ssub.s32 %s30, %s37
      %s178 = sor.u32 %s176, %s177
      %p179 = scmp.eq.s32.totalorder %s178, 0
      %s181 = sadd.s32 %s180, 1
      %s182 = scalar_select %p179, %s180, %s181
      %p185 = pneg %p179
      %p186 = scmp.eq.s32.totalorder %s22, 1
      %p187 = por %p185, %p186
      %p188 = scmp.ne.s32.totalorder %s180, %s183
      %p189 = scmp.eq.s32.totalorder %s22, 0
      %p190 = por %p188, %p189
      %p191 = scmp.ne.s32.totalorder %s180, %s183
      %p192 = scmp.eq.s32.totalorder %s27, 1
      %p193 = por %p191, %p192
      %p194 = scmp.ne.s32.totalorder %s183, %s184
      %p195 = scmp.eq.s32.totalorder %s27, 0
      %p196 = por %p194, %p195
      %p197 = scmp.ne.s32.totalorder %s183, %s184
      %p198 = scmp.eq.s32.totalorder %s28, 1
      %p199 = por %p197, %p198
      %p201 = scmp.ne.s32.totalorder %s184, %s200
      %p202 = scmp.eq.s32.totalorder %s28, 0
      %p203 = por %p201, %p202
      %p204 = scmp.le.s32.totalorder 1, %s22
      %p205 = scmp.lt.s32.totalorder %s22, 3
      %p206 = pnand %p204, %p205
      %p207 = pneg %p206
      // Predicated region
      $region9: #{tpu_custom_call.1} parent=5 // pred_check
        _
      $region10: #{tpu_custom_call.1} parent=5 // pred_check_branch
        %209 = sbr.rel (%p206) target = $region12
      $region11: #{tpu_custom_call.1} parent=5 // pred_region
        %s210 = ssub.s32 %s22, 1
        // Predicated region
        $region13: #{tpu_custom_call.1} parent=11 // pred_check
          %p211 = pneg %p60
        $region14: #{tpu_custom_call.1} parent=11 // pred_check_branch
          %213 = sbr.rel (%p211) target = $region16
        $region15: #{tpu_custom_call.1} parent=11 // pred_region
          %s214 = smul.u32 2, %s31
          %216 = vsyncadd [#allocation3], 0
          %s217 = smul.addr %s214, 2
          %s218 = smul.addr %s217, 8
          %s219 = scalar_lea.hbm %s0, %s218
          %s220 = sshll.u32 %s219, 4
          %s221 = int_to_ptr.hbm [resolvable:$true] %s220
          %s222 = sshll.u32 [#allocation2], 4
          %s223 = int_to_ptr.vmem [resolvable:$true] %s222
          %228 = dma.hbm_to_vmem [thread:$0]  %s221, 512, %s223, [#allocation3], 256, 256, 16
        $region16: #{tpu_custom_call.1} parent=11 // pred_fallthru
          _
      $region12: #{tpu_custom_call.1} parent=5 // pred_fallthru
        _
      %p229 = scmp.lt.s32.totalorder %s22, 2
      // Predicated region
      $region17: #{tpu_custom_call.1} parent=5 // pred_check
        %p230 = pneg %p229
      $region18: #{tpu_custom_call.1} parent=5 // pred_check_branch
        %232 = sbr.rel (%p230) target = $region20
      $region19: #{tpu_custom_call.1} parent=5 // pred_region
        // Predicated region
        $region21: #{tpu_custom_call.1} parent=19 // pred_check
          %p233 = pneg %p80
        $region22: #{tpu_custom_call.1} parent=19 // pred_check_branch
          %235 = sbr.rel (%p233) target = $region24
        $region23: #{tpu_custom_call.1} parent=19 // pred_region
          %s236 = sand.u32 %s22, 1
          %s237 = scalar_lea.sflag [#allocation6], %s236
          %s238 = sand.u32 %s70, 1
          %s239 = smul.addr %s238, 128
          %s240 = scalar_lea.vmem [#allocation5], %s239
          %242 = vsyncadd %s237, 0
          %s243 = smul.addr %s30, 4
          %s244 = scalar_lea.hbm %s1, %s243
          %s245 = sshll.u32 %s244, 4
          %s246 = int_to_ptr.hbm [resolvable:$true] %s245
          %s247 = sshll.u32 %s240, 4
          %s248 = int_to_ptr.vmem [resolvable:$true] %s247
          %253 = dma.hbm_to_vmem [thread:$0]  %s246, 2048, %s248, %s237, 128, 64, 4
        $region24: #{tpu_custom_call.1} parent=19 // pred_fallthru
          _
        // Predicated region
        $region25: #{tpu_custom_call.1} parent=19 // pred_check
          %p254 = pneg %p106
        $region26: #{tpu_custom_call.1} parent=19 // pred_check_branch
          %256 = sbr.rel (%p254) target = $region28
        $region27: #{tpu_custom_call.1} parent=19 // pred_region
          %s257 = sand.u32 %s22, 1
          %s258 = scalar_lea.sflag [#allocation6], %s257
          %s259 = sand.u32 %s96, 1
          %s260 = scalar_lea.vmem [#allocation7], %s259
          %262 = vsyncadd %s258, 0
          %s263 = scalar_lea.hbm %s2, %s30
          %s265 = sshll.u32 %s263, 4
          %s266 = int_to_ptr.hbm [resolvable:$true] %s265
          %s267 = sshll.u32 %s260, 4
          %s268 = int_to_ptr.vmem [resolvable:$true] %s267
          %270 = dma.hbm_to_vmem [thread:$0]  %s266, 16, %s268, %s258
        $region28: #{tpu_custom_call.1} parent=19 // pred_fallthru
          _
      $region20: #{tpu_custom_call.1} parent=5 // pred_fallthru
        _
      %p271 = scmp.le.s32.totalorder 1, %s22
      %p272 = scmp.lt.s32.totalorder %s22, 3
      %p273 = pnand %p271, %p272
      %p274 = pneg %p273
      // Predicated region
      $region29: #{tpu_custom_call.1} parent=5 // pred_check
        _
      $region30: #{tpu_custom_call.1} parent=5 // pred_check_branch
        %276 = sbr.rel (%p273) target = $region32
      $region31: #{tpu_custom_call.1} parent=5 // pred_region
        %s277 = ssub.s32 %s22, 1
        // Predicated region
        $region33: #{tpu_custom_call.1} parent=31 // pred_check
          %p278 = pneg %p60
        $region34: #{tpu_custom_call.1} parent=31 // pred_check_branch
          %280 = sbr.rel (%p278) target = $region36
        $region35: #{tpu_custom_call.1} parent=31 // pred_region
          %282 = dma.done [#allocation3], 512
        $region36: #{tpu_custom_call.1} parent=31 // pred_fallthru
          _
        %s283 = sand.u32 %s27, 1
        %s284 = scalar_lea.sflag [#allocation6], %s283
        %s285 = sand.u32 %s73, 1
        %s286 = smul.addr %s285, 128
        %s287 = scalar_lea.vmem [#allocation5], %s286
        // Predicated region
        $region37: #{tpu_custom_call.1} parent=31 // pred_check
          %p288 = pneg %p86
        $region38: #{tpu_custom_call.1} parent=31 // pred_check_branch
          %290 = sbr.rel (%p288) target = $region40
        $region39: #{tpu_custom_call.1} parent=31 // pred_region
          %292 = dma.done %s284, 2048
        $region40: #{tpu_custom_call.1} parent=31 // pred_fallthru
          _
        %s293 = sand.u32 %s27, 1
        %s294 = scalar_lea.sflag [#allocation6], %s293
        %s295 = sand.u32 %s99, 1
        %s296 = scalar_lea.vmem [#allocation7], %s295
        // Predicated region
        $region41: #{tpu_custom_call.1} parent=31 // pred_check
          %p297 = pneg %p112
        $region42: #{tpu_custom_call.1} parent=31 // pred_check_branch
          %299 = sbr.rel (%p297) target = $region44
        $region43: #{tpu_custom_call.1} parent=31 // pred_region
          %301 = dma.done %s294, 16
        $region44: #{tpu_custom_call.1} parent=31 // pred_fallthru
          _
        %p302 = pneg %p60
        %p303 = pneg %p57
        %s304 = sand.u32 %s27, 1
        %s305 = scalar_lea.sflag [#allocation6], %s304
        %s306 = sand.u32 %s73, 1
        %s307 = smul.addr %s306, 128
        %s308 = scalar_lea.vmem [#allocation5], %s307
        %p309 = pneg %p86
        %p310 = pneg %p83
        %s311 = sand.u32 %s27, 1
        %s312 = scalar_lea.sflag [#allocation6], %s311
        %s313 = sand.u32 %s99, 1
        %s314 = scalar_lea.vmem [#allocation7], %s313
        %p315 = pneg %p112
        %p316 = pneg %p109
        %p317 = pneg %p140
        %p318 = pneg %p137
        %s319 = sand.u32 %s127, 1
        %s320 = scalar_lea.sflag [#allocation4], %s319
        %s321 = sand.u32 %s127, 1
        %s322 = smul.addr %s321, 16
        %s323 = scalar_lea.vmem [#allocation8], %s322
        %p324 = pneg %p168
        %p325 = pneg %p165
        %s326 = sand.u32 %s27, 1
        %s327 = scalar_lea.sflag [#allocation10], %s326
        %s328 = sand.u32 %s155, 1
        %s329 = smul.addr %s328, 8
        %s330 = scalar_lea.vmem [#allocation9], %s329
        %p331 = pneg %p196
        %p332 = pneg %p193
        %s333 = sand.u32 %s27, 1
        %s334 = scalar_lea.sflag [#allocation10], %s333
        %s335 = sand.u32 %s183, 1
        %s336 = smul.addr %s335, 8
        %s337 = scalar_lea.vmem [#allocation11], %s336
        %s338 = smul.u32 2, %s31
        %s339 = smul.u32 2, %s31
        %v340 = vld [vmem:[#allocation2] sm:$0xff]
        %v341 = vld [vmem:[#allocation2 + $0x8] sm:$0xff]
        %v342 = vld [vmem:[#allocation2 + $0x10] sm:$0xff]
        %v343 = vld [vmem:[#allocation2 + $0x18] sm:$0xff]
        %v344 = vpack.c.bf16 %v342, %v340
        %v345 = vpack.c.bf16 %v343, %v341
        %v346 = vld [vmem:[%s287] sm:$0xf]
        %v347 = vld [vmem:[%s287 + $0x4] sm:$0xf]
        %v348 = vld [vmem:[%s287 + $0x8] sm:$0xf]
        %v349 = vld [vmem:[%s287 + $0xc] sm:$0xf]
        %v350 = vld [vmem:[%s287 + $0x10] sm:$0xf]
        %v351 = vld [vmem:[%s287 + $0x14] sm:$0xf]
        %v352 = vld [vmem:[%s287 + $0x18] sm:$0xf]
        %v353 = vld [vmem:[%s287 + $0x1c] sm:$0xf]
        %v354 = vld [vmem:[%s287 + $0x20] sm:$0xf]
        %v355 = vld [vmem:[%s287 + $0x24] sm:$0xf]
        %v356 = vld [vmem:[%s287 + $0x28] sm:$0xf]
        %v357 = vld [vmem:[%s287 + $0x2c] sm:$0xf]
        %v358 = vld [vmem:[%s287 + $0x30] sm:$0xf]
        %v359 = vld [vmem:[%s287 + $0x34] sm:$0xf]
        %v360 = vld [vmem:[%s287 + $0x38] sm:$0xf]
        %v361 = vld [vmem:[%s287 + $0x3c] sm:$0xf]
        %v362 = vld [vmem:[%s287 + $0x40] sm:$0xf]
        %v363 = vld [vmem:[%s287 + $0x44] sm:$0xf]
        %v364 = vld [vmem:[%s287 + $0x48] sm:$0xf]
        %v365 = vld [vmem:[%s287 + $0x4c] sm:$0xf]
        %v366 = vld [vmem:[%s287 + $0x50] sm:$0xf]
        %v367 = vld [vmem:[%s287 + $0x54] sm:$0xf]
        %v368 = vld [vmem:[%s287 + $0x58] sm:$0xf]
        %v369 = vld [vmem:[%s287 + $0x5c] sm:$0xf]
        %v370 = vld [vmem:[%s287 + $0x60] sm:$0xf]
        %v371 = vld [vmem:[%s287 + $0x64] sm:$0xf]
        %v372 = vld [vmem:[%s287 + $0x68] sm:$0xf]
        %v373 = vld [vmem:[%s287 + $0x6c] sm:$0xf]
        %v374 = vld [vmem:[%s287 + $0x70] sm:$0xf]
        %v375 = vld [vmem:[%s287 + $0x74] sm:$0xf]
        %v376 = vld [vmem:[%s287 + $0x78] sm:$0xf]
        %v377 = vld [vmem:[%s287 + $0x7c] sm:$0xf]
        %v378 = vld [vmem:[%s296] sm:$0x1]
        %v380 = vperm.slane %v378, 0
        %v414 = vunpack.c.l.b16 %v346
        %v415 = vunpack.c.l.b16 %v347
        %v416 = vunpack.c.l.b16 %v348
        %v417 = vunpack.c.l.b16 %v349
        %v418 = vunpack.c.l.b16 %v350
        %v419 = vunpack.c.l.b16 %v351
        %v420 = vunpack.c.l.b16 %v352
        %v421 = vunpack.c.l.b16 %v353
        %v422 = vunpack.c.l.b16 %v354
        %v423 = vunpack.c.l.b16 %v355
        %v424 = vunpack.c.l.b16 %v356
        %v425 = vunpack.c.l.b16 %v357
        %v426 = vunpack.c.l.b16 %v358
        %v427 = vunpack.c.l.b16 %v359
        %v428 = vunpack.c.l.b16 %v360
        %v429 = vunpack.c.l.b16 %v361
        %v430 = vunpack.c.l.b16 %v362
        %v431 = vunpack.c.l.b16 %v363
        %v432 = vunpack.c.l.b16 %v364
        %v433 = vunpack.c.l.b16 %v365
        %v434 = vunpack.c.l.b16 %v366
        %v435 = vunpack.c.l.b16 %v367
        %v436 = vunpack.c.l.b16 %v368
        %v437 = vunpack.c.l.b16 %v369
        %v438 = vunpack.c.l.b16 %v370
        %v439 = vunpack.c.l.b16 %v371
        %v440 = vunpack.c.l.b16 %v372
        %v441 = vunpack.c.l.b16 %v373
        %v442 = vunpack.c.l.b16 %v374
        %v443 = vunpack.c.l.b16 %v375
        %v444 = vunpack.c.l.b16 %v376
        %v445 = vunpack.c.l.b16 %v377
        %v446 = vpack.c.b16 %v415, %v414
        %v447 = vpack.c.b16 %v417, %v416
        %v448 = vpack.c.b16 %v419, %v418
        %v449 = vpack.c.b16 %v421, %v420
        %v450 = vpack.c.b16 %v423, %v422
        %v451 = vpack.c.b16 %v425, %v424
        %v452 = vpack.c.b16 %v427, %v426
        %v453 = vpack.c.b16 %v429, %v428
        %v454 = vpack.c.b16 %v431, %v430
        %v455 = vpack.c.b16 %v433, %v432
        %v456 = vpack.c.b16 %v435, %v434
        %v457 = vpack.c.b16 %v437, %v436
        %v458 = vpack.c.b16 %v439, %v438
        %v459 = vpack.c.b16 %v441, %v440
        %v460 = vpack.c.b16 %v443, %v442
        %v461 = vpack.c.b16 %v445, %v444
        %478 = vmatpush.bf16.msra.mxu0 %v453
        %479 = vmatpush.bf16.msra.mxu0 %v452
        %480 = vmatpush.bf16.msra.mxu0 %v451
        %481 = vmatpush.bf16.msra.mxu0 %v450
        %482 = vmatpush.bf16.msra.mxu0 %v449
        %483 = vmatpush.bf16.msra.mxu0 %v448
        %484 = vmatpush.bf16.msra.mxu0 %v447
        %485 = vmatpush.bf16.msra.mxu0 %v446
        %486 = vmatmul.bf16.gmra.mxu0 %v344
        %v487 = vpop.f32.mrf.mxu0
        %v488 = vadd.f32 %v380, %v487
        %v489 = vpop.f32.mrf.mxu0
        %v490 = vadd.f32 %v380, %v489
        %491 = vdwg.mxu0
        %492 = vmatpush.bf16.msra.mxu0 %v461
        %493 = vmatpush.bf16.msra.mxu0 %v460
        %494 = vmatpush.bf16.msra.mxu0 %v459
        %495 = vmatpush.bf16.msra.mxu0 %v458
        %496 = vmatpush.bf16.msra.mxu0 %v457
        %497 = vmatpush.bf16.msra.mxu0 %v456
        %498 = vmatpush.bf16.msra.mxu0 %v455
        %499 = vmatpush.bf16.msra.mxu0 %v454
        %500 = vmatmul.bf16.gmra.mxu0 %v345
        %v501 = vpop.f32.mrf.mxu0
        %v502 = vadd.f32 %v488, %v501
        %v503 = vpop.f32.mrf.mxu0
        %v504 = vadd.f32 %v490, %v503
        %505 = vdwg.mxu0
        %506 = vst [vmem:[%s323] sm:$0xff] %v502
        %507 = vst [vmem:[%s323 + $0x8] sm:$0xff] %v504
        %v508 = vmul.f32 %v502, %v502
        %v509 = vmul.f32 %v504, %v504
        %v510 = vadd.f32 %v508, %v509
        %511 = vadd.xlane.f32.xlu0 %v510
        %v512 = vpop.xlane.xlu0 %511
        %v513 = vrot.slane %v512, 4
        %v514 = vadd.f32 %v512, %v513
        %v515 = vrot.slane %v514, 2
        %v516 = vadd.f32 %v514, %v515
        %v517 = vrot.slane %v516, 1
        %v518 = vadd.f32 %v516, %v517
        %s519 = vtos %v518
        %v520 = vstv %s519
        %v521 = vadd.f32 %v520, 0.0
        %522 = vst [vmem:[%s337] sm:$0xff] %v521
        %p523 = scmp.eq.s32.totalorder %s32, 0
        // Predicated region
        $region45: #{tpu_custom_call.1} parent=31 // pred_check
          %p524 = pneg %p523
        $region46: #{tpu_custom_call.1} parent=31 // pred_check_branch
          %526 = sbr.rel (%p524) target = $region48
        $region47: #{tpu_custom_call.1} parent=31 // pred_region
          %v527 = vmul.f32 %v340, %v340
          %v528 = vmul.f32 %v341, %v341
          %v529 = vmul.f32 %v342, %v342
          %v530 = vmul.f32 %v343, %v343
          %v531 = vadd.f32 %v527, %v528
          %v532 = vadd.f32 %v531, %v529
          %v533 = vadd.f32 %v532, %v530
          %534 = vadd.xlane.f32.xlu0 %v533
          %v535 = vpop.xlane.xlu0 %534
          %v536 = vrot.slane %v535, 4
          %v537 = vadd.f32 %v535, %v536
          %v538 = vrot.slane %v537, 2
          %v539 = vadd.f32 %v537, %v538
          %v540 = vrot.slane %v539, 1
          %v541 = vadd.f32 %v539, %v540
          %s542 = vtos %v541
          %v543 = vstv %s542
          %v544 = vadd.f32 %v543, 0.0
          %545 = vst [vmem:[%s330] sm:$0xff] %v544
        $region48: #{tpu_custom_call.1} parent=31 // pred_fallthru
          _
        %p546 = scmp.ne.s32.totalorder %s32, 0
        // Predicated region
        $region49: #{tpu_custom_call.1} parent=31 // pred_check
          %p547 = pneg %p546
        $region50: #{tpu_custom_call.1} parent=31 // pred_check_branch
          %549 = sbr.rel (%p547) target = $region52
        $region51: #{tpu_custom_call.1} parent=31 // pred_region
          %550 = vst [vmem:[%s330] sm:$0xff] 0.0
        $region52: #{tpu_custom_call.1} parent=31 // pred_fallthru
          _
        %s551 = sand.u32 %s127, 1
        %s552 = scalar_lea.sflag [#allocation4], %s551
        %s553 = sand.u32 %s127, 1
        %s554 = smul.addr %s553, 16
        %s555 = scalar_lea.vmem [#allocation8], %s554
        %s556 = sand.u32 %s27, 1
        %s557 = scalar_lea.sflag [#allocation10], %s556
        %s558 = sand.u32 %s155, 1
        %s559 = smul.addr %s558, 8
        %s560 = scalar_lea.vmem [#allocation9], %s559
        %s561 = sand.u32 %s27, 1
        %s562 = scalar_lea.sflag [#allocation10], %s561
        %s563 = sand.u32 %s183, 1
        %s564 = smul.addr %s563, 8
        %s565 = scalar_lea.vmem [#allocation11], %s564
        // Predicated region
        $region53: #{tpu_custom_call.1} parent=31 // pred_check
          %p566 = pneg %p137
        $region54: #{tpu_custom_call.1} parent=31 // pred_check_branch
          %568 = sbr.rel (%p566) target = $region56
        $region55: #{tpu_custom_call.1} parent=31 // pred_region
          %s569 = smul.u32 2, %s31
          %571 = vsyncadd %s552, 0
          %s572 = smul.addr %s569, 2
          %s573 = sadd.s32 %s32, %s572
          %s574 = smul.addr %s573, 8
          %s575 = scalar_lea.hbm %s3, %s574
          %s576 = sshll.u32 %s555, 4
          %s577 = int_to_ptr.vmem [resolvable:$true] %s576
          %s578 = sshll.u32 %s575, 4
          %s579 = int_to_ptr.hbm [resolvable:$true] %s578
          %584 = dma.vmem_to_hbm [thread:$0]  %s577, 256, %s579, %s552, 128, 256, 8
        $region56: #{tpu_custom_call.1} parent=31 // pred_fallthru
          _
        // Predicated region
        $region57: #{tpu_custom_call.1} parent=31 // pred_check
          %p585 = pneg %p165
        $region58: #{tpu_custom_call.1} parent=31 // pred_check_branch
          %587 = sbr.rel (%p585) target = $region60
        $region59: #{tpu_custom_call.1} parent=31 // pred_region
          %589 = vsyncadd %s557, 0
          %s590 = smul.addr %s31, 2
          %s591 = sadd.s32 %s32, %s590
          %s592 = smul.addr %s591, 8
          %s593 = scalar_lea.hbm %s4, %s592
          %s595 = sshll.u32 %s560, 4
          %s596 = int_to_ptr.vmem [resolvable:$true] %s595
          %s597 = sshll.u32 %s593, 4
          %s598 = int_to_ptr.hbm [resolvable:$true] %s597
          %600 = dma.vmem_to_hbm [thread:$0]  %s596, 128, %s598, %s557
        $region60: #{tpu_custom_call.1} parent=31 // pred_fallthru
          _
        // Predicated region
        $region61: #{tpu_custom_call.1} parent=31 // pred_check
          %p601 = pneg %p193
        $region62: #{tpu_custom_call.1} parent=31 // pred_check_branch
          %603 = sbr.rel (%p601) target = $region64
        $region63: #{tpu_custom_call.1} parent=31 // pred_region
          %605 = vsyncadd %s562, 0
          %s606 = smul.addr %s31, 2
          %s607 = sadd.s32 %s32, %s606
          %s608 = smul.addr %s607, 8
          %s609 = scalar_lea.hbm %s5, %s608
          %s611 = sshll.u32 %s565, 4
          %s612 = int_to_ptr.vmem [resolvable:$true] %s611
          %s613 = sshll.u32 %s609, 4
          %s614 = int_to_ptr.hbm [resolvable:$true] %s613
          %616 = dma.vmem_to_hbm [thread:$0]  %s612, 128, %s614, %s562
        $region64: #{tpu_custom_call.1} parent=31 // pred_fallthru
          _
      $region32: #{tpu_custom_call.1} parent=5 // pred_fallthru
        _
      %p617 = scmp.le.s32.totalorder 2, %s22
      // Predicated region
      $region65: #{tpu_custom_call.1} parent=5 // pred_check
        %p618 = pneg %p617
      $region66: #{tpu_custom_call.1} parent=5 // pred_check_branch
        %620 = sbr.rel (%p618) target = $region68
      $region67: #{tpu_custom_call.1} parent=5 // pred_region
        %s621 = ssub.s32 %s22, 2
        // Predicated region
        $region69: #{tpu_custom_call.1} parent=67 // pred_check
          %p622 = pneg %p143
        $region70: #{tpu_custom_call.1} parent=67 // pred_check_branch
          %624 = sbr.rel (%p622) target = $region72
        $region71: #{tpu_custom_call.1} parent=67 // pred_region
          %s625 = sand.u32 %s128, 1
          %s626 = scalar_lea.sflag [#allocation4], %s625
          %s627 = sand.u32 %s128, 1
          %s628 = smul.addr %s627, 16
          %s629 = scalar_lea.vmem [#allocation8], %s628
          %631 = dma.done %s626, 256
        $region72: #{tpu_custom_call.1} parent=67 // pred_fallthru
          _
        // Predicated region
        $region73: #{tpu_custom_call.1} parent=67 // pred_check
          %p632 = pneg %p171
        $region74: #{tpu_custom_call.1} parent=67 // pred_check_branch
          %634 = sbr.rel (%p632) target = $region76
        $region75: #{tpu_custom_call.1} parent=67 // pred_region
          %s635 = sand.u32 %s28, 1
          %s636 = scalar_lea.sflag [#allocation10], %s635
          %s637 = sand.u32 %s156, 1
          %s638 = smul.addr %s637, 8
          %s639 = scalar_lea.vmem [#allocation9], %s638
          %641 = dma.done %s636, 128
        $region76: #{tpu_custom_call.1} parent=67 // pred_fallthru
          _
        // Predicated region
        $region77: #{tpu_custom_call.1} parent=67 // pred_check
          %p642 = pneg %p199
        $region78: #{tpu_custom_call.1} parent=67 // pred_check_branch
          %644 = sbr.rel (%p642) target = $region80
        $region79: #{tpu_custom_call.1} parent=67 // pred_region
          %s645 = sand.u32 %s28, 1
          %s646 = scalar_lea.sflag [#allocation10], %s645
          %s647 = sand.u32 %s184, 1
          %s648 = smul.addr %s647, 8
          %s649 = scalar_lea.vmem [#allocation11], %s648
          %651 = dma.done %s646, 128
        $region80: #{tpu_custom_call.1} parent=67 // pred_fallthru
          _
      $region68: #{tpu_custom_call.1} parent=5 // pred_fallthru
        _
    $region6: #{tpu_custom_call.1} parent=1 // loop_footer
      %s26 = sadd.s32 1, %s22
    $region7: #{tpu_custom_call.1} parent=1 // loop_footer_branch
      %21 = sbr.rel target = $region3
    $region8: #{tpu_custom_call.1} parent=1 // loop_exit
      _
    %652 = vsyncpa [#allocation3], 1
    %s653 = scalar_lea.sflag [#allocation3], 1
    %654 = vsyncpa %s653, 1
    %655 = vsyncpa [#allocation6], 1
    %s656 = scalar_lea.sflag [#allocation6], 1
    %657 = vsyncpa %s656, 1
    %658 = vsyncpa [#allocation4], 1
    %s659 = scalar_lea.sflag [#allocation4], 1
    %660 = vsyncpa %s659, 1
    %661 = vsyncpa [#allocation10], 1
    %s662 = scalar_lea.sflag [#allocation10], 1
    %663 = vsyncpa %s662, 1

</llo_original>
